<compile_context>
chip_gen: v6e
topology: v6e:2x2x1
jax: 0.10.0
libtpu: 0.0.40
codegen_flags: <defaults>
</compile_context>

<pallas_src>
import jax
import jax.numpy as jnp
from jax.experimental import pallas as pl
from jax.experimental.pallas import tpu as pltpu


def _round_up(n, m):
    return ((n + m - 1) // m) * m


def _leaky_relu(h, slope=0.2):
    return jnp.where(h > 0, h, slope * h)


def _critic_kernel(x_ref, att_ref,
                   w1x_ref, w1a_ref, b1_ref,
                   w2_ref, b2_ref,
                   w3_ref, b3_ref,
                   o_ref):
    """Fused forward for one (tm, ...) batch tile. Everything stays in VMEM."""
    wdt = w1x_ref.dtype  # bf16 weights -> run the MXU at native bf16 rate

    # fc1 on the concatenated input, computed as a sum of two matmuls
    h1 = (jnp.dot(x_ref[...].astype(wdt), w1x_ref[...],
                  preferred_element_type=jnp.float32)
          + jnp.dot(att_ref[...].astype(wdt), w1a_ref[...],
                    preferred_element_type=jnp.float32)
          + b1_ref[...])
    h1 = _leaky_relu(h1)

    # fc2
    h2 = (jnp.dot(h1.astype(wdt), w2_ref[...],
                  preferred_element_type=jnp.float32)
          + b2_ref[...])
    h2 = _leaky_relu(h2)

    # fc3 (critic head, N=1): VPU multiply + lane reduction instead of an
    # N=1 MXU matmul (same vmatmul pushes as N=256 otherwise, 1/256 the output).
    out = (jnp.sum(h2 * w3_ref[...].astype(jnp.float32),
                   axis=-1, keepdims=True)
           + b3_ref[...])
    o_ref[...] = out.astype(o_ref.dtype)


def make_critic_params(W1, b1, W2, b2, W3, b3, res_size,
                       *, weight_dtype=jnp.bfloat16):
    """One-time parameter prep (NOT in the hot path).

    Pre-transposes, splits W1 into its x/att column blocks, zero-pads every
    dimension to a lane-aligned multiple of 128, and stores weights in bf16.
    Zero padding is exact: padded input columns / hidden units contribute 0.
    """
    ndh = W1.shape[0]
    att_size = W1.shape[1] - res_size
    res_p = _round_up(res_size, 128)
    att_p = _round_up(att_size, 128)
    ndh_p = _round_up(ndh, 128)

    def pad2(a, rows, cols):
        a = jnp.asarray(a, jnp.float32)
        return jnp.pad(a, ((0, rows - a.shape[0]), (0, cols - a.shape[1])))

    w1x_t = pad2(jnp.asarray(W1)[:, :res_size].T, res_p, ndh_p).astype(weight_dtype)
    w1a_t = pad2(jnp.asarray(W1)[:, res_size:].T, att_p, ndh_p).astype(weight_dtype)
    w2_t = pad2(jnp.asarray(W2).T, ndh_p, ndh_p).astype(weight_dtype)
    w3_row = pad2(jnp.asarray(W3).reshape(1, ndh), 1, ndh_p).astype(weight_dtype)
    b1_2d = pad2(jnp.asarray(b1).reshape(1, ndh), 1, ndh_p)
    b2_2d = pad2(jnp.asarray(b2).reshape(1, ndh), 1, ndh_p)
    b3_2d = jnp.asarray(b3, jnp.float32).reshape(1, 1)

    meta = (res_size, att_size, res_p, att_p, ndh_p)
    return (w1x_t, w1a_t, b1_2d, w2_t, b2_2d, w3_row, b3_2d, meta)


def _pick_tm(B):
    """Batch tile: >=2 grid steps for B>=16 (v7x has 2 TCs), up to 512 rows."""
    if B <= 8:
        return 8
    half = -(-B // 2)                 # ceil(B/2)
    tm = _round_up(half, 8)           # sublane-aligned
    return min(tm, 512)


def _vmem_limit_bytes(tm, res_p, att_p, ndh_p, weight_itemsize):
    # Resident (possibly double-buffered) weight blocks + biases + double-
    # buffered per-step activation tiles, plus headroom for compiler scratch.
    weights = ((res_p + att_p + ndh_p + 1) * ndh_p) * weight_itemsize
    biases = (2 * ndh_p + 1) * 4
    acts = 2 * tm * (res_p + att_p + 1) * 4
    need = 2 * weights + biases + acts + (8 << 20)
    # Cap well below v7x's 64 MiB per-TC physical VMEM (scoped default 32 MiB).
    return int(min(max(need, 16 << 20), 48 << 20))


def mlp_2hl_critic(x, att, params, *, tm=None):
    """x: (B, resSize) f32; att: (B, attSize) f32; params from make_critic_params."""
    w1x_t, w1a_t, b1_2d, w2_t, b2_2d, w3_row, b3_2d, meta = params
    res_size, att_size, res_p, att_p, ndh_p = meta
    B = x.shape[0]
    assert x.shape == (B, res_size) and att.shape == (B, att_size)

    # Fully-resident-weight design: guard the VMEM scaling limit.
    weight_bytes = ((w1x_t.size + w1a_t.size + w2_t.size + w3_row.size)
                    * w1x_t.dtype.itemsize)
    # TODO(synk): add an ndh-column tiling grid axis once resident weights
    # approach the per-TC VMEM budget (~40 MiB usable on v7x).
    assert weight_bytes < (40 << 20), "weights too large for resident design"

    if tm is None:
        tm = _pick_tm(B)
    tm = min(tm, _round_up(B, 8))
    b_pad = _round_up(B, tm)

    # Zero-pad rows (batch tail) and columns (lane alignment) off the hot path;
    # no-ops when shapes are already aligned.
    if x.shape != (b_pad, res_p):
        x = jnp.pad(x, ((0, b_pad - B), (0, res_p - res_size)))
    if att.shape != (b_pad, att_p):
        att = jnp.pad(att, ((0, b_pad - B), (0, att_p - att_size)))

    grid = (b_pad // tm,)

    out = pl.pallas_call(
        _critic_kernel,
        out_shape=jax.ShapeDtypeStruct((b_pad, 1), jnp.float32),
        grid_spec=pltpu.PrefetchScalarGridSpec(
            num_scalar_prefetch=0,
            grid=grid,
            in_specs=[
                pl.BlockSpec((tm, res_p), lambda i: (i, 0)),       # x tile
                pl.BlockSpec((tm, att_p), lambda i: (i, 0)),       # att tile
                pl.BlockSpec((res_p, ndh_p), lambda i: (0, 0)),    # W1[:, :res].T
                pl.BlockSpec((att_p, ndh_p), lambda i: (0, 0)),    # W1[:, res:].T
                pl.BlockSpec((1, ndh_p), lambda i: (0, 0)),        # b1
                pl.BlockSpec((ndh_p, ndh_p), lambda i: (0, 0)),    # W2.T
                pl.BlockSpec((1, ndh_p), lambda i: (0, 0)),        # b2
                pl.BlockSpec((1, ndh_p), lambda i: (0, 0)),        # W3 row
                pl.BlockSpec((1, 1), lambda i: (0, 0)),            # b3
            ],
            out_specs=pl.BlockSpec((tm, 1), lambda i: (i, 0)),
        ),
        compiler_params=pltpu.CompilerParams(
            dimension_semantics=("parallel",),
            vmem_limit_bytes=_vmem_limit_bytes(
                tm, res_p, att_p, ndh_p, w1x_t.dtype.itemsize),
        ),
    )(x, att, w1x_t, w1a_t, b1_2d, w2_t, b2_2d, w3_row, b3_2d)

    return out[:B] if b_pad != B else out


if __name__ == "__main__":
    # Small shapes consistent with the module (opt.resSize, opt.attSize, opt.ndh).
    # Deliberately NOT lane-aligned and not tile-divisible, to exercise the
    # padding paths and the >=2-step batch grid.
    B, resSize, attSize, ndh = 24, 200, 85, 160

    key = jax.random.PRNGKey(0)
    k1, k2, k3, kx, ka = jax.random.split(key, 5)

    # weights_init: Linear weight ~ N(0, 0.02), bias = 0
    W1 = 0.02 * jax.random.normal(k1, (ndh, resSize + attSize), dtype=jnp.float32)
    b1 = jnp.zeros((ndh,), dtype=jnp.float32)
    W2 = 0.02 * jax.random.normal(k2, (ndh, ndh), dtype=jnp.float32)
    b2 = jnp.zeros((ndh,), dtype=jnp.float32)
    W3 = 0.02 * jax.random.normal(k3, (1, ndh), dtype=jnp.float32)
    b3 = jnp.zeros((1,), dtype=jnp.float32)

    x = jax.random.normal(kx, (B, resSize), dtype=jnp.float32)
    att = jax.random.normal(ka, (B, attSize), dtype=jnp.float32)

    params = make_critic_params(W1, b1, W2, b2, W3, b3, resSize)

    out = mlp_2hl_critic(x, att, params)
    out = jax.block_until_ready(out)

    # Pure-JAX f32 reference (mirrors the PyTorch forward exactly).
    def ref_forward(x, att):
        h = jnp.concatenate([x, att], axis=1)
        h = jax.nn.leaky_relu(h @ W1.T + b1, 0.2)
        h = jax.nn.leaky_relu(h @ W2.T + b2, 0.2)
        return h @ W3.T + b3

    ref = ref_forward(x, att)
    assert out.shape == (B, 1), out.shape
    # bf16 weight/activation storage with f32 accumulation -> loose tolerance.
    assert jnp.allclose(out, ref, atol=1e-2, rtol=2e-2), (
        "mismatch vs reference", float(jnp.max(jnp.abs(out - ref))))

    print("KERNEL_OK")
</pallas_src>

<mosaic_0001>
module attributes {stable_mosaic.version = 11 : i64} {
  func.func @_critic_kernel(%arg0: i32, %arg1: memref<16x256xf32, #tpu.memory_space<vmem>>, %arg2: memref<16x128xf32, #tpu.memory_space<vmem>>, %arg3: memref<256x256xbf16, #tpu.memory_space<vmem>>, %arg4: memref<128x256xbf16, #tpu.memory_space<vmem>>, %arg5: memref<1x256xf32, #tpu.memory_space<vmem>>, %arg6: memref<256x256xbf16, #tpu.memory_space<vmem>>, %arg7: memref<1x256xf32, #tpu.memory_space<vmem>>, %arg8: memref<1x256xbf16, #tpu.memory_space<vmem>>, %arg9: memref<1x1xf32, #tpu.memory_space<vmem>>, %arg10: memref<16x1xf32, #tpu.memory_space<vmem>>) attributes {dimension_semantics = [#tpu.dimension_semantics<parallel>], iteration_bounds = array<i64: 2>, scalar_prefetch = 0 : i64, scratch_operands = 0 : i64, tpu.core_type = #tpu.core_type<tc>, window_params = [{transform_indices = @transform_0, window_bounds = array<i64: 16, 256>}, {transform_indices = @transform_1, window_bounds = array<i64: 16, 128>}, {pipeline_mode = #tpu.pipeline_mode<synchronous>, transform_indices = @transform_2, window_bounds = array<i64: 256, 256>}, {pipeline_mode = #tpu.pipeline_mode<synchronous>, transform_indices = @transform_3, window_bounds = array<i64: 128, 256>}, {pipeline_mode = #tpu.pipeline_mode<synchronous>, transform_indices = @transform_4, window_bounds = array<i64: 1, 256>}, {pipeline_mode = #tpu.pipeline_mode<synchronous>, transform_indices = @transform_5, window_bounds = array<i64: 256, 256>}, {pipeline_mode = #tpu.pipeline_mode<synchronous>, transform_indices = @transform_6, window_bounds = array<i64: 1, 256>}, {pipeline_mode = #tpu.pipeline_mode<synchronous>, transform_indices = @transform_7, window_bounds = array<i64: 1, 256>}, {pipeline_mode = #tpu.pipeline_mode<synchronous>, transform_indices = @transform_8, window_bounds = array<i64: 1, 1>}, {transform_indices = @transform_9, window_bounds = array<i64: 16, 1>}]} {
    %c0 = arith.constant 0 : index
    %c0_0 = arith.constant 0 : index
    %0 = vector.load %arg1[%c0, %c0_0] : memref<16x256xf32, #tpu.memory_space<vmem>>, vector<16x256xf32>
    %1 = arith.truncf %0 : vector<16x256xf32> to vector<16x256xbf16>
    %c0_1 = arith.constant 0 : index
    %c0_2 = arith.constant 0 : index
    %2 = vector.load %arg3[%c0_1, %c0_2] : memref<256x256xbf16, #tpu.memory_space<vmem>>, vector<256x256xbf16>
    %cst = arith.constant dense<0.000000e+00> : vector<16x256xf32>
    %3 = tpu.matmul %1, %2, %cst {dimension_numbers = #tpu.dot_dimension_numbers<[1], [0], [0], [1], [0, 0, 1, 1], [], []>} : vector<16x256xbf16>, vector<256x256xbf16>, vector<16x256xf32> -> vector<16x256xf32>
    %c0_3 = arith.constant 0 : index
    %c0_4 = arith.constant 0 : index
    %4 = vector.load %arg2[%c0_3, %c0_4] : memref<16x128xf32, #tpu.memory_space<vmem>>, vector<16x128xf32>
    %5 = arith.truncf %4 : vector<16x128xf32> to vector<16x128xbf16>
    %c0_5 = arith.constant 0 : index
    %c0_6 = arith.constant 0 : index
    %6 = vector.load %arg4[%c0_5, %c0_6] : memref<128x256xbf16, #tpu.memory_space<vmem>>, vector<128x256xbf16>
    %cst_7 = arith.constant dense<0.000000e+00> : vector<16x256xf32>
    %7 = tpu.matmul %5, %6, %cst_7 {dimension_numbers = #tpu.dot_dimension_numbers<[1], [0], [0], [1], [0, 0, 1, 1], [], []>} : vector<16x128xbf16>, vector<128x256xbf16>, vector<16x256xf32> -> vector<16x256xf32>
    %8 = arith.addf %3, %7 : vector<16x256xf32>
    %c0_8 = arith.constant 0 : index
    %c0_9 = arith.constant 0 : index
    %9 = vector.load %arg5[%c0_8, %c0_9] : memref<1x256xf32, #tpu.memory_space<vmem>>, vector<1x256xf32>
    %10 = vector.broadcast %9 : vector<1x256xf32> to vector<16x256xf32>
    %11 = arith.addf %8, %10 : vector<16x256xf32>
    %cst_10 = arith.constant 0.000000e+00 : f32
    %12 = vector.broadcast %cst_10 : f32 to vector<16x256xf32>
    %13 = arith.cmpf ogt, %11, %12 : vector<16x256xf32>
    %cst_11 = arith.constant 2.000000e-01 : f32
    %14 = vector.broadcast %cst_11 : f32 to vector<16x256xf32>
    %15 = arith.mulf %14, %11 : vector<16x256xf32>
    %16 = arith.select %13, %11, %15 : vector<16x256xi1>, vector<16x256xf32>
    %17 = arith.truncf %16 : vector<16x256xf32> to vector<16x256xbf16>
    %c0_12 = arith.constant 0 : index
    %c0_13 = arith.constant 0 : index
    %18 = vector.load %arg6[%c0_12, %c0_13] : memref<256x256xbf16, #tpu.memory_space<vmem>>, vector<256x256xbf16>
    %cst_14 = arith.constant dense<0.000000e+00> : vector<16x256xf32>
    %19 = tpu.matmul %17, %18, %cst_14 {dimension_numbers = #tpu.dot_dimension_numbers<[1], [0], [0], [1], [0, 0, 1, 1], [], []>} : vector<16x256xbf16>, vector<256x256xbf16>, vector<16x256xf32> -> vector<16x256xf32>
    %c0_15 = arith.constant 0 : index
    %c0_16 = arith.constant 0 : index
    %20 = vector.load %arg7[%c0_15, %c0_16] : memref<1x256xf32, #tpu.memory_space<vmem>>, vector<1x256xf32>
    %21 = vector.broadcast %20 : vector<1x256xf32> to vector<16x256xf32>
    %22 = arith.addf %19, %21 : vector<16x256xf32>
    %cst_17 = arith.constant 0.000000e+00 : f32
    %23 = vector.broadcast %cst_17 : f32 to vector<16x256xf32>
    %24 = arith.cmpf ogt, %22, %23 : vector<16x256xf32>
    %cst_18 = arith.constant 2.000000e-01 : f32
    %25 = vector.broadcast %cst_18 : f32 to vector<16x256xf32>
    %26 = arith.mulf %25, %22 : vector<16x256xf32>
    %27 = arith.select %24, %22, %26 : vector<16x256xi1>, vector<16x256xf32>
    %c0_19 = arith.constant 0 : index
    %c0_20 = arith.constant 0 : index
    %28 = vector.load %arg8[%c0_19, %c0_20] : memref<1x256xbf16, #tpu.memory_space<vmem>>, vector<1x256xbf16>
    %29 = arith.extf %28 : vector<1x256xbf16> to vector<1x256xf32>
    %30 = vector.broadcast %29 : vector<1x256xf32> to vector<16x256xf32>
    %31 = arith.mulf %27, %30 : vector<16x256xf32>
    %cst_21 = arith.constant dense<0.000000e+00> : vector<16xf32>
    %32 = vector.multi_reduction <add>, %31, %cst_21 [1] : vector<16x256xf32> to vector<16xf32>
    %33 = vector.shape_cast %32 : vector<16xf32> to vector<16x1xf32>
    %c0_22 = arith.constant 0 : index
    %c0_23 = arith.constant 0 : index
    %34 = vector.load %arg9[%c0_22, %c0_23] : memref<1x1xf32, #tpu.memory_space<vmem>>, vector<1x1xf32>
    %35 = vector.broadcast %34 : vector<1x1xf32> to vector<16x1xf32>
    %36 = arith.addf %33, %35 : vector<16x1xf32>
    %c0_24 = arith.constant 0 : index
    %c0_25 = arith.constant 0 : index
    %37 = vector.load %arg10[%c0_24, %c0_25] : memref<16x1xf32, #tpu.memory_space<vmem>>, vector<16x1xf32>
    tpu.vector_store %arg10[%c0_24, %c0_25], %36 {strides = array<i32>} : memref<16x1xf32, #tpu.memory_space<vmem>>, vector<16x1xf32>,
    return
  }
  func.func @transform_0(%arg0: i32) -> (i32, i32) {
    %c0_i32 = arith.constant 0 : i32
    %c0_i32_0 = arith.constant 0 : i32
    return %arg0, %c0_i32 : i32, i32
  }
  func.func @transform_1(%arg0: i32) -> (i32, i32) {
    %c0_i32 = arith.constant 0 : i32
    %c0_i32_0 = arith.constant 0 : i32
    return %arg0, %c0_i32 : i32, i32
  }
  func.func @transform_2(%arg0: i32) -> (i32, i32) {
    %c0_i32 = arith.constant 0 : i32
    %c0_i32_0 = arith.constant 0 : i32
    %c0_i32_1 = arith.constant 0 : i32
    return %c0_i32, %c0_i32_0 : i32, i32
  }
  func.func @transform_3(%arg0: i32) -> (i32, i32) {
    %c0_i32 = arith.constant 0 : i32
    %c0_i32_0 = arith.constant 0 : i32
    %c0_i32_1 = arith.constant 0 : i32
    return %c0_i32, %c0_i32_0 : i32, i32
  }
  func.func @transform_4(%arg0: i32) -> (i32, i32) {
    %c0_i32 = arith.constant 0 : i32
    %c0_i32_0 = arith.constant 0 : i32
    %c0_i32_1 = arith.constant 0 : i32
    return %c0_i32, %c0_i32_0 : i32, i32
  }
  func.func @transform_5(%arg0: i32) -> (i32, i32) {
    %c0_i32 = arith.constant 0 : i32
    %c0_i32_0 = arith.constant 0 : i32
    %c0_i32_1 = arith.constant 0 : i32
    return %c0_i32, %c0_i32_0 : i32, i32
  }
  func.func @transform_6(%arg0: i32) -> (i32, i32) {
    %c0_i32 = arith.constant 0 : i32
    %c0_i32_0 = arith.constant 0 : i32
    %c0_i32_1 = arith.constant 0 : i32
    return %c0_i32, %c0_i32_0 : i32, i32
  }
  func.func @transform_7(%arg0: i32) -> (i32, i32) {
    %c0_i32 = arith.constant 0 : i32
    %c0_i32_0 = arith.constant 0 : i32
    %c0_i32_1 = arith.constant 0 : i32
    return %c0_i32, %c0_i32_0 : i32, i32
  }
  func.func @transform_8(%arg0: i32) -> (i32, i32) {
    %c0_i32 = arith.constant 0 : i32
    %c0_i32_0 = arith.constant 0 : i32
    %c0_i32_1 = arith.constant 0 : i32
    return %c0_i32, %c0_i32_0 : i32, i32
  }
  func.func @transform_9(%arg0: i32) -> (i32, i32) {
    %c0_i32 = arith.constant 0 : i32
    %c0_i32_0 = arith.constant 0 : i32
    return %arg0, %c0_i32 : i32, i32
  }
}

</mosaic_0001>

<llo_original>
// kernel: tpu_custom_call.1
$region0: #{tpu_custom_call.1}
  #allocation0 [shape = 'u32[]', space=smem, size = 0x4, offset = 0x4, fixed_abs, tag = 'smem constant byte address 0x4 - core index']
  #allocation1 [shape = 'u32[144,128]{1,0:T(1,128)}', space=vmem, size = 0x12000, scoped, tag = 'internal scratch']
  #allocation2 [shape = 'f32[1,1]{1,0:T(1,128)S(1)}', space=vmem, size = 0x200, scoped, tag = 'scoped memory for tpu_custom_call.1']
  %s0 = inlined_call_operand.hbm [shape: f32[32,256], index: 0, kind: input, shape index: {}]
  %s1 = inlined_call_operand.hbm [shape: f32[32,128], index: 1, kind: input, shape index: {}]
  %s2 = inlined_call_operand.hbm [shape: bf16[256,256], index: 2, kind: input, shape index: {}]
  %s3 = inlined_call_operand.hbm [shape: bf16[128,256], index: 3, kind: input, shape index: {}]
  %s4 = inlined_call_operand.vmem [shape: f32[1,256], index: 4, kind: input, shape index: {}]
  %s5 = inlined_call_operand.hbm [shape: bf16[256,256], index: 5, kind: input, shape index: {}]
  %s6 = inlined_call_operand.vmem [shape: f32[1,256], index: 6, kind: input, shape index: {}]
  %s7 = inlined_call_operand.vmem [shape: bf16[1,256], index: 7, kind: input, shape index: {}]
  %s8 = inlined_call_operand.<no memory space> [shape: f32[1,1], index: 8, kind: input, shape index: {}]
  %s9 = inlined_call_operand.vmem [shape: f32[32,1], index: 9, kind: output, shape index: {}]
  %s10 = sld [smem:[#allocation0]]
  $region89: #{tpu_custom_call.1} parent=0
    _
  %s12 = ssub.s32 1, %s10
  %s13 = scalar_select 0, %s12, %s10
  %v14 = vstv %s8
  %15 = vst [vmem:[#allocation2] sm:$0x1] %v14
  $region1: #{tpu_custom_call.1} parent=0
    #allocation3 [shape = 'u8[32768]{0}', space=vmem, size = 0x8000, scoped, tag = 'input window, operand 0']
    #allocation4 [shape = 's32[2]{0}', space=sflag, size = 0x8, scoped, tag = 'scoped memory for tpu_custom_call.1']
    #allocation5 [shape = 'u8[16384]{0}', space=vmem, size = 0x4000, scoped, tag = 'input window, operand 1']
    #allocation6 [shape = 's32[2]{0}', space=sflag, size = 0x8, scoped, tag = 'scoped memory for tpu_custom_call.1']
    #allocation7 [shape = 'u8[131072]{0}', space=vmem, size = 0x20000, scoped, tag = 'input window, operand 2, single buffered']
    #allocation8 [shape = 'u8[65536]{0}', space=vmem, size = 0x10000, scoped, tag = 'input window, operand 3, single buffered']
    #allocation9 [shape = 's32[1]{0}', space=sflag, size = 0x4, scoped, tag = 'scoped memory for tpu_custom_call.1']
    #allocation10 [shape = 'u8[131072]{0}', space=vmem, size = 0x20000, scoped, tag = 'input window, operand 5, single buffered']
    %16 = vsyncpa [#allocation4], 0
    %s17 = scalar_lea.sflag [#allocation4], 1
    %18 = vsyncpa %s17, 0
    %19 = vsyncpa [#allocation6], 0
    %s20 = scalar_lea.sflag [#allocation6], 1
    %21 = vsyncpa %s20, 0
    %22 = vsyncpa [#allocation9], 0
    loop: start=0, step=1, limit=4
    $region2: #{tpu_custom_call.1} parent=1 // loop_pre_header
      _
    $region3: #{tpu_custom_call.1} parent=1 // loop_header
      %s24 = sphi 0, %s28
      %p25 = scmp.ge.s32.totalorder %s24, 4
      %s34 = sphi 0, %s36
      %s37 = sphi 0, %s34
      %s38 = sphi 0, %s37
      %s54 = sphi 0, %s38
      %s60 = sphi 0, %s62
      %s63 = sphi 0, %s60
      %s64 = sphi 0, %s63
      %s80 = sphi 0, %s64
      %s84 = sphi 0, %s84
      %s86 = sphi 0, %s84
      %s87 = sphi 0, %s86
      %s101 = sphi 0, %s87
      %s105 = sphi 0, %s105
      %s107 = sphi 0, %s105
      %s108 = sphi 0, %s107
      %s122 = sphi 0, %s108
      %s126 = sphi 0, %s126
      %s128 = sphi 0, %s126
      %s129 = sphi 0, %s128
      %s143 = sphi 0, %s129
      %s147 = sphi 0, %s147
      %s149 = sphi 0, %s147
      %s150 = sphi 0, %s149
      %s164 = sphi 0, %s150
      %s168 = sphi 0, %s168
      %s170 = sphi 0, %s168
      %s171 = sphi 0, %s170
      %s185 = sphi 0, %s171
      %s189 = sphi 0, %s189
      %s191 = sphi 0, %s189
      %s192 = sphi 0, %s191
      %s206 = sphi 0, %s192
      %s210 = sphi 0, %s210
      %s212 = sphi 0, %s210
      %s213 = sphi 0, %s212
      %s227 = sphi 0, %s213
      %s233 = sphi 0, %s235
      %s236 = sphi 0, %s233
      %s237 = sphi 0, %s236
      %s253 = sphi 0, %s237
    $region4: #{tpu_custom_call.1} parent=1 // loop_header_branch
      %27 = sbr.rel (%p25) target = $region8
    $region5: #{tpu_custom_call.1} parent=1 // loop_body
      %s29 = ssub.s32 %s24, 1
      %s30 = ssub.s32 %s24, 2
      %s31 = sadd.s32 %s24, 1
      %s32 = ssub.s32 %s24, %s31
      %p33 = scmp.eq.s32.totalorder %s32, 0
      %s35 = sadd.s32 %s34, 1
      %s36 = scalar_select %p33, %s34, %s35
      %p39 = pneg %p33
      %p40 = scmp.eq.s32.totalorder %s24, 1
      %p41 = por %p39, %p40
      %p42 = scmp.ne.s32.totalorder %s34, %s37
      %p43 = scmp.eq.s32.totalorder %s24, 0
      %p44 = por %p42, %p43
      %p45 = scmp.ne.s32.totalorder %s34, %s37
      %p46 = scmp.eq.s32.totalorder %s29, 1
      %p47 = por %p45, %p46
      %p48 = scmp.ne.s32.totalorder %s37, %s38
      %p49 = scmp.eq.s32.totalorder %s29, 0
      %p50 = por %p48, %p49
      %p51 = scmp.ne.s32.totalorder %s37, %s38
      %p52 = scmp.eq.s32.totalorder %s30, 1
      %p53 = por %p51, %p52
      %p55 = scmp.ne.s32.totalorder %s38, %s54
      %p56 = scmp.eq.s32.totalorder %s30, 0
      %p57 = por %p55, %p56
      %s58 = ssub.s32 %s24, %s31
      %p59 = scmp.eq.s32.totalorder %s58, 0
      %s61 = sadd.s32 %s60, 1
      %s62 = scalar_select %p59, %s60, %s61
      %p65 = pneg %p59
      %p66 = scmp.eq.s32.totalorder %s24, 1
      %p67 = por %p65, %p66
      %p68 = scmp.ne.s32.totalorder %s60, %s63
      %p69 = scmp.eq.s32.totalorder %s24, 0
      %p70 = por %p68, %p69
      %p71 = scmp.ne.s32.totalorder %s60, %s63
      %p72 = scmp.eq.s32.totalorder %s29, 1
      %p73 = por %p71, %p72
      %p74 = scmp.ne.s32.totalorder %s63, %s64
      %p75 = scmp.eq.s32.totalorder %s29, 0
      %p76 = por %p74, %p75
      %p77 = scmp.ne.s32.totalorder %s63, %s64
      %p78 = scmp.eq.s32.totalorder %s30, 1
      %p79 = por %p77, %p78
      %p81 = scmp.ne.s32.totalorder %s64, %s80
      %p82 = scmp.eq.s32.totalorder %s30, 0
      %p83 = por %p81, %p82
      %s85 = sadd.s32 %s84, 1
      %p88 = scmp.eq.s32.totalorder %s24, 1
      %p89 = scmp.ne.s32.totalorder %s84, %s86
      %p90 = scmp.eq.s32.totalorder %s24, 0
      %p91 = por %p89, %p90
      %p92 = scmp.ne.s32.totalorder %s84, %s86
      %p93 = scmp.eq.s32.totalorder %s29, 1
      %p94 = por %p92, %p93
      %p95 = scmp.ne.s32.totalorder %s86, %s87
      %p96 = scmp.eq.s32.totalorder %s29, 0
      %p97 = por %p95, %p96
      %p98 = scmp.ne.s32.totalorder %s86, %s87
      %p99 = scmp.eq.s32.totalorder %s30, 1
      %p100 = por %p98, %p99
      %p102 = scmp.ne.s32.totalorder %s87, %s101
      %p103 = scmp.eq.s32.totalorder %s30, 0
      %p104 = por %p102, %p103
      %s106 = sadd.s32 %s105, 1
      %p109 = scmp.eq.s32.totalorder %s24, 1
      %p110 = scmp.ne.s32.totalorder %s105, %s107
      %p111 = scmp.eq.s32.totalorder %s24, 0
      %p112 = por %p110, %p111
      %p113 = scmp.ne.s32.totalorder %s105, %s107
      %p114 = scmp.eq.s32.totalorder %s29, 1
      %p115 = por %p113, %p114
      %p116 = scmp.ne.s32.totalorder %s107, %s108
      %p117 = scmp.eq.s32.totalorder %s29, 0
      %p118 = por %p116, %p117
      %p119 = scmp.ne.s32.totalorder %s107, %s108
      %p120 = scmp.eq.s32.totalorder %s30, 1
      %p121 = por %p119, %p120
      %p123 = scmp.ne.s32.totalorder %s108, %s122
      %p124 = scmp.eq.s32.totalorder %s30, 0
      %p125 = por %p123, %p124
      %s127 = sadd.s32 %s126, 1
      %p130 = scmp.eq.s32.totalorder %s24, 1
      %p131 = scmp.ne.s32.totalorder %s126, %s128
      %p132 = scmp.eq.s32.totalorder %s24, 0
      %p133 = por %p131, %p132
      %p134 = scmp.ne.s32.totalorder %s126, %s128
      %p135 = scmp.eq.s32.totalorder %s29, 1
      %p136 = por %p134, %p135
      %p137 = scmp.ne.s32.totalorder %s128, %s129
      %p138 = scmp.eq.s32.totalorder %s29, 0
      %p139 = por %p137, %p138
      %p140 = scmp.ne.s32.totalorder %s128, %s129
      %p141 = scmp.eq.s32.totalorder %s30, 1
      %p142 = por %p140, %p141
      %p144 = scmp.ne.s32.totalorder %s129, %s143
      %p145 = scmp.eq.s32.totalorder %s30, 0
      %p146 = por %p144, %p145
      %s148 = sadd.s32 %s147, 1
      %p151 = scmp.eq.s32.totalorder %s24, 1
      %p152 = scmp.ne.s32.totalorder %s147, %s149
      %p153 = scmp.eq.s32.totalorder %s24, 0
      %p154 = por %p152, %p153
      %p155 = scmp.ne.s32.totalorder %s147, %s149
      %p156 = scmp.eq.s32.totalorder %s29, 1
      %p157 = por %p155, %p156
      %p158 = scmp.ne.s32.totalorder %s149, %s150
      %p159 = scmp.eq.s32.totalorder %s29, 0
      %p160 = por %p158, %p159
      %p161 = scmp.ne.s32.totalorder %s149, %s150
      %p162 = scmp.eq.s32.totalorder %s30, 1
      %p163 = por %p161, %p162
      %p165 = scmp.ne.s32.totalorder %s150, %s164
      %p166 = scmp.eq.s32.totalorder %s30, 0
      %p167 = por %p165, %p166
      %s169 = sadd.s32 %s168, 1
      %p172 = scmp.eq.s32.totalorder %s24, 1
      %p173 = scmp.ne.s32.totalorder %s168, %s170
      %p174 = scmp.eq.s32.totalorder %s24, 0
      %p175 = por %p173, %p174
      %p176 = scmp.ne.s32.totalorder %s168, %s170
      %p177 = scmp.eq.s32.totalorder %s29, 1
      %p178 = por %p176, %p177
      %p179 = scmp.ne.s32.totalorder %s170, %s171
      %p180 = scmp.eq.s32.totalorder %s29, 0
      %p181 = por %p179, %p180
      %p182 = scmp.ne.s32.totalorder %s170, %s171
      %p183 = scmp.eq.s32.totalorder %s30, 1
      %p184 = por %p182, %p183
      %p186 = scmp.ne.s32.totalorder %s171, %s185
      %p187 = scmp.eq.s32.totalorder %s30, 0
      %p188 = por %p186, %p187
      %s190 = sadd.s32 %s189, 1
      %p193 = scmp.eq.s32.totalorder %s24, 1
      %p194 = scmp.ne.s32.totalorder %s189, %s191
      %p195 = scmp.eq.s32.totalorder %s24, 0
      %p196 = por %p194, %p195
      %p197 = scmp.ne.s32.totalorder %s189, %s191
      %p198 = scmp.eq.s32.totalorder %s29, 1
      %p199 = por %p197, %p198
      %p200 = scmp.ne.s32.totalorder %s191, %s192
      %p201 = scmp.eq.s32.totalorder %s29, 0
      %p202 = por %p200, %p201
      %p203 = scmp.ne.s32.totalorder %s191, %s192
      %p204 = scmp.eq.s32.totalorder %s30, 1
      %p205 = por %p203, %p204
      %p207 = scmp.ne.s32.totalorder %s192, %s206
      %p208 = scmp.eq.s32.totalorder %s30, 0
      %p209 = por %p207, %p208
      %s211 = sadd.s32 %s210, 1
      %p214 = scmp.eq.s32.totalorder %s24, 1
      %p215 = scmp.ne.s32.totalorder %s210, %s212
      %p216 = scmp.eq.s32.totalorder %s24, 0
      %p217 = por %p215, %p216
      %p218 = scmp.ne.s32.totalorder %s210, %s212
      %p219 = scmp.eq.s32.totalorder %s29, 1
      %p220 = por %p218, %p219
      %p221 = scmp.ne.s32.totalorder %s212, %s213
      %p222 = scmp.eq.s32.totalorder %s29, 0
      %p223 = por %p221, %p222
      %p224 = scmp.ne.s32.totalorder %s212, %s213
      %p225 = scmp.eq.s32.totalorder %s30, 1
      %p226 = por %p224, %p225
      %p228 = scmp.ne.s32.totalorder %s213, %s227
      %p229 = scmp.eq.s32.totalorder %s30, 0
      %p230 = por %p228, %p229
      %s231 = ssub.s32 %s24, %s31
      %p232 = scmp.eq.s32.totalorder %s231, 0
      %s234 = sadd.s32 %s233, 1
      %s235 = scalar_select %p232, %s233, %s234
      %p238 = pneg %p232
      %p239 = scmp.eq.s32.totalorder %s24, 1
      %p240 = por %p238, %p239
      %p241 = scmp.ne.s32.totalorder %s233, %s236
      %p242 = scmp.eq.s32.totalorder %s24, 0
      %p243 = por %p241, %p242
      %p244 = scmp.ne.s32.totalorder %s233, %s236
      %p245 = scmp.eq.s32.totalorder %s29, 1
      %p246 = por %p244, %p245
      %p247 = scmp.ne.s32.totalorder %s236, %s237
      %p248 = scmp.eq.s32.totalorder %s29, 0
      %p249 = por %p247, %p248
      %p250 = scmp.ne.s32.totalorder %s236, %s237
      %p251 = scmp.eq.s32.totalorder %s30, 1
      %p252 = por %p250, %p251
      %p254 = scmp.ne.s32.totalorder %s237, %s253
      %p255 = scmp.eq.s32.totalorder %s30, 0
      %p256 = por %p254, %p255
      %p257 = scmp.le.s32.totalorder 1, %s24
      %p258 = scmp.lt.s32.totalorder %s24, 3
      %p259 = pnand %p257, %p258
      %p260 = pneg %p259
      // Predicated region
      $region9: #{tpu_custom_call.1} parent=5 // pred_check
        _
      $region10: #{tpu_custom_call.1} parent=5 // pred_check_branch
        %262 = sbr.rel (%p259) target = $region12
      $region11: #{tpu_custom_call.1} parent=5 // pred_region
        %s263 = ssub.s32 %s24, 1
        // Predicated region
        $region13: #{tpu_custom_call.1} parent=11 // pred_check
          %p264 = pneg %p97
        $region14: #{tpu_custom_call.1} parent=11 // pred_check_branch
          %266 = sbr.rel (%p264) target = $region16
        $region15: #{tpu_custom_call.1} parent=11 // pred_region
          %s268 = ssub.s32 4096, 4096
          %269 = vsyncadd [#allocation6], %s268
          %s270 = sshll.u32 [#allocation7], 4
          %s271 = int_to_ptr.vmem [resolvable:$true] %s270
          %276 = dma.hbm_to_vmem [thread:$0]  %s2, 4096, %s271, [#allocation6], 128, 128, 8
        $region16: #{tpu_custom_call.1} parent=11 // pred_fallthru
          _
        // Predicated region
        $region17: #{tpu_custom_call.1} parent=11 // pred_check
          %p277 = pneg %p118
        $region18: #{tpu_custom_call.1} parent=11 // pred_check_branch
          %279 = sbr.rel (%p277) target = $region20
        $region19: #{tpu_custom_call.1} parent=11 // pred_region
          %s281 = ssub.s32 2048, 2048
          %282 = vsyncadd [#allocation9], %s281
          %s283 = sshll.u32 [#allocation8], 4
          %s284 = int_to_ptr.vmem [resolvable:$true] %s283
          %289 = dma.hbm_to_vmem [thread:$0]  %s3, 2048, %s284, [#allocation9], 128, 128, 8
        $region20: #{tpu_custom_call.1} parent=11 // pred_fallthru
          _
        // Predicated region
        $region21: #{tpu_custom_call.1} parent=11 // pred_check
          %p290 = pneg %p139
        $region22: #{tpu_custom_call.1} parent=11 // pred_check_branch
          %292 = sbr.rel (%p290) target = $region24
        $region23: #{tpu_custom_call.1} parent=11 // pred_region
          _
        $region24: #{tpu_custom_call.1} parent=11 // pred_fallthru
          _
        // Predicated region
        $region25: #{tpu_custom_call.1} parent=11 // pred_check
          %p293 = pneg %p160
        $region26: #{tpu_custom_call.1} parent=11 // pred_check_branch
          %295 = sbr.rel (%p293) target = $region28
        $region27: #{tpu_custom_call.1} parent=11 // pred_region
          %s297 = ssub.s32 4096, 4096
          %298 = vsyncadd [#allocation9], %s297
          %s299 = sshll.u32 [#allocation10], 4
          %s300 = int_to_ptr.vmem [resolvable:$true] %s299
          %305 = dma.hbm_to_vmem [thread:$0]  %s5, 4096, %s300, [#allocation9], 128, 128, 8
        $region28: #{tpu_custom_call.1} parent=11 // pred_fallthru
          _
        // Predicated region
        $region29: #{tpu_custom_call.1} parent=11 // pred_check
          %p306 = pneg %p181
        $region30: #{tpu_custom_call.1} parent=11 // pred_check_branch
          %308 = sbr.rel (%p306) target = $region32
        $region31: #{tpu_custom_call.1} parent=11 // pred_region
          _
        $region32: #{tpu_custom_call.1} parent=11 // pred_fallthru
          _
        // Predicated region
        $region33: #{tpu_custom_call.1} parent=11 // pred_check
          %p309 = pneg %p202
        $region34: #{tpu_custom_call.1} parent=11 // pred_check_branch
          %311 = sbr.rel (%p309) target = $region36
        $region35: #{tpu_custom_call.1} parent=11 // pred_region
          _
        $region36: #{tpu_custom_call.1} parent=11 // pred_fallthru
          _
        // Predicated region
        $region37: #{tpu_custom_call.1} parent=11 // pred_check
          %p312 = pneg %p223
        $region38: #{tpu_custom_call.1} parent=11 // pred_check_branch
          %314 = sbr.rel (%p312) target = $region40
        $region39: #{tpu_custom_call.1} parent=11 // pred_region
          _
        $region40: #{tpu_custom_call.1} parent=11 // pred_fallthru
          _
      $region12: #{tpu_custom_call.1} parent=5 // pred_fallthru
        _
      %p315 = scmp.lt.s32.totalorder %s24, 2
      // Predicated region
      $region41: #{tpu_custom_call.1} parent=5 // pred_check
        %p316 = pneg %p315
      $region42: #{tpu_custom_call.1} parent=5 // pred_check_branch
        %318 = sbr.rel (%p316) target = $region44
      $region43: #{tpu_custom_call.1} parent=5 // pred_region
        // Predicated region
        $region45: #{tpu_custom_call.1} parent=43 // pred_check
          %p319 = pneg %p44
        $region46: #{tpu_custom_call.1} parent=43 // pred_check_branch
          %321 = sbr.rel (%p319) target = $region48
        $region47: #{tpu_custom_call.1} parent=43 // pred_region
          %s322 = sand.u32 %s34, 1
          %s323 = scalar_lea.sflag [#allocation4], %s322
          %s324 = sand.u32 %s34, 1
          %s325 = smul.addr %s324, 32
          %s326 = scalar_lea.vmem [#allocation3], %s325
          %s327 = smul.u32 2, %s24
          %s329 = ssub.s32 512, 512
          %330 = vsyncadd %s323, %s329
          %s331 = smul.addr %s327, 2
          %s332 = smul.addr %s331, 128
          %s333 = scalar_lea.hbm %s0, %s332
          %s334 = sshll.u32 %s326, 4
          %s335 = int_to_ptr.vmem [resolvable:$true] %s334
          %340 = dma.hbm_to_vmem [thread:$0]  %s333, 512, %s335, %s323, 256, 256, 16
        $region48: #{tpu_custom_call.1} parent=43 // pred_fallthru
          _
        // Predicated region
        $region49: #{tpu_custom_call.1} parent=43 // pred_check
          %p341 = pneg %p70
        $region50: #{tpu_custom_call.1} parent=43 // pred_check_branch
          %343 = sbr.rel (%p341) target = $region52
        $region51: #{tpu_custom_call.1} parent=43 // pred_region
          %s344 = sand.u32 %s24, 1
          %s345 = scalar_lea.sflag [#allocation6], %s344
          %s346 = sand.u32 %s60, 1
          %s347 = smul.addr %s346, 16
          %s348 = scalar_lea.vmem [#allocation5], %s347
          %s349 = smul.u32 2, %s24
          %s351 = ssub.s32 256, 256
          %352 = vsyncadd %s345, %s351
          %s353 = smul.addr %s349, 128
          %s354 = scalar_lea.hbm %s1, %s353
          %s355 = sshll.u32 %s348, 4
          %s356 = int_to_ptr.vmem [resolvable:$true] %s355
          %361 = dma.hbm_to_vmem [thread:$0]  %s354, 256, %s356, %s345, 128, 128, 8
        $region52: #{tpu_custom_call.1} parent=43 // pred_fallthru
          _
      $region44: #{tpu_custom_call.1} parent=5 // pred_fallthru
        _
      %p362 = scmp.le.s32.totalorder 1, %s24
      %p363 = scmp.lt.s32.totalorder %s24, 3
      %p364 = pnand %p362, %p363
      %p365 = pneg %p364
      // Predicated region
      $region53: #{tpu_custom_call.1} parent=5 // pred_check
        _
      $region54: #{tpu_custom_call.1} parent=5 // pred_check_branch
        %367 = sbr.rel (%p364) target = $region56
      $region55: #{tpu_custom_call.1} parent=5 // pred_region
        %s368 = ssub.s32 %s24, 1
        %s369 = sand.u32 %s37, 1
        %s370 = scalar_lea.sflag [#allocation4], %s369
        %s371 = sand.u32 %s37, 1
        %s372 = smul.addr %s371, 32
        %s373 = scalar_lea.vmem [#allocation3], %s372
        // Predicated region
        $region57: #{tpu_custom_call.1} parent=55 // pred_check
          %p374 = pneg %p50
        $region58: #{tpu_custom_call.1} parent=55 // pred_check_branch
          %376 = sbr.rel (%p374) target = $region60
        $region59: #{tpu_custom_call.1} parent=55 // pred_region
          %377 = dma.done %s370, 512
        $region60: #{tpu_custom_call.1} parent=55 // pred_fallthru
          _
        %s378 = sand.u32 %s29, 1
        %s379 = scalar_lea.sflag [#allocation6], %s378
        %s380 = sand.u32 %s63, 1
        %s381 = smul.addr %s380, 16
        %s382 = scalar_lea.vmem [#allocation5], %s381
        // Predicated region
        $region61: #{tpu_custom_call.1} parent=55 // pred_check
          %p383 = pneg %p76
        $region62: #{tpu_custom_call.1} parent=55 // pred_check_branch
          %385 = sbr.rel (%p383) target = $region64
        $region63: #{tpu_custom_call.1} parent=55 // pred_region
          %386 = dma.done %s379, 256
        $region64: #{tpu_custom_call.1} parent=55 // pred_fallthru
          _
        // Predicated region
        $region65: #{tpu_custom_call.1} parent=55 // pred_check
          %p387 = pneg %p97
        $region66: #{tpu_custom_call.1} parent=55 // pred_check_branch
          %389 = sbr.rel (%p387) target = $region68
        $region67: #{tpu_custom_call.1} parent=55 // pred_region
          %390 = dma.done [#allocation6], 4096
        $region68: #{tpu_custom_call.1} parent=55 // pred_fallthru
          _
        // Predicated region
        $region69: #{tpu_custom_call.1} parent=55 // pred_check
          %p391 = pneg %p118
        $region70: #{tpu_custom_call.1} parent=55 // pred_check_branch
          %393 = sbr.rel (%p391) target = $region72
        $region71: #{tpu_custom_call.1} parent=55 // pred_region
          %394 = dma.done [#allocation9], 2048
        $region72: #{tpu_custom_call.1} parent=55 // pred_fallthru
          _
        // Predicated region
        $region73: #{tpu_custom_call.1} parent=55 // pred_check
          %p395 = pneg %p160
        $region74: #{tpu_custom_call.1} parent=55 // pred_check_branch
          %397 = sbr.rel (%p395) target = $region76
        $region75: #{tpu_custom_call.1} parent=55 // pred_region
          %398 = dma.done [#allocation9], 4096
        $region76: #{tpu_custom_call.1} parent=55 // pred_fallthru
          _
        %s399 = sand.u32 %s37, 1
        %s400 = scalar_lea.sflag [#allocation4], %s399
        %s401 = sand.u32 %s37, 1
        %s402 = smul.addr %s401, 32
        %s403 = scalar_lea.vmem [#allocation3], %s402
        %p404 = pneg %p50
        %p405 = pneg %p47
        %s406 = sand.u32 %s29, 1
        %s407 = scalar_lea.sflag [#allocation6], %s406
        %s408 = sand.u32 %s63, 1
        %s409 = smul.addr %s408, 16
        %s410 = scalar_lea.vmem [#allocation5], %s409
        %p411 = pneg %p76
        %p412 = pneg %p73
        %p413 = pneg %p97
        %p414 = pneg %p94
        %p415 = pneg %p118
        %p416 = pneg %p115
        %p417 = pneg %p139
        %p418 = pneg %p136
        %p419 = pneg %p160
        %p420 = pneg %p157
        %p421 = pneg %p181
        %p422 = pneg %p178
        %p423 = pneg %p202
        %p424 = pneg %p199
        %p425 = pneg %p223
        %p426 = pneg %p220
        %p427 = pneg %p249
        %p428 = pneg %p246
        %s429 = smul.u32 2, %s29
        %p430 = scmp.lt.s32.totalorder %s429, 3
        %s431 = scalar_select %p430, %s429, 3
        %s432 = smul.addr %s431, 8
        %s433 = scalar_lea.vmem %s9, %s432
        %s434 = smul.u32 2, %s29
        %s435 = smul.u32 2, %s29
        %s436 = smul.u32 2, %s29
        %p437 = scmp.lt.s32.totalorder %s436, 3
        %s438 = scalar_select %p437, %s436, 3
        %s439 = smul.addr %s438, 8
        %s440 = scalar_lea.vmem %s9, %s439
        %s441 = smul.u32 2, %s29
        %v443 = vld [vmem:[%s373] sm:$0xff]
        %v444 = vld [vmem:[%s373 + $0x8] sm:$0xff]
        %v445 = vld [vmem:[%s373 + $0x10] sm:$0xff]
        %v446 = vld [vmem:[%s373 + $0x18] sm:$0xff]
        %v447 = vpack.c.bf16 %v445, %v443
        %v448 = vpack.c.bf16 %v446, %v444
        %v449 = vld [vmem:[#allocation7] sm:$0xff]
        %v450 = vld [vmem:[#allocation7 + $0x8] sm:$0xff]
        %v451 = vld [vmem:[#allocation7 + $0x10] sm:$0xff]
        %v452 = vld [vmem:[#allocation7 + $0x18] sm:$0xff]
        %v453 = vld [vmem:[#allocation7 + $0x20] sm:$0xff]
        %v454 = vld [vmem:[#allocation7 + $0x28] sm:$0xff]
        %v455 = vld [vmem:[#allocation7 + $0x30] sm:$0xff]
        %v456 = vld [vmem:[#allocation7 + $0x38] sm:$0xff]
        %v457 = vld [vmem:[#allocation7 + $0x40] sm:$0xff]
        %v458 = vld [vmem:[#allocation7 + $0x48] sm:$0xff]
        %v459 = vld [vmem:[#allocation7 + $0x50] sm:$0xff]
        %v460 = vld [vmem:[#allocation7 + $0x58] sm:$0xff]
        %v461 = vld [vmem:[#allocation7 + $0x60] sm:$0xff]
        %v462 = vld [vmem:[#allocation7 + $0x68] sm:$0xff]
        %v463 = vld [vmem:[#allocation7 + $0x70] sm:$0xff]
        %v464 = vld [vmem:[#allocation7 + $0x78] sm:$0xff]
        %v465 = vld [vmem:[#allocation7 + $0x80] sm:$0xff]
        %v466 = vld [vmem:[#allocation7 + $0x88] sm:$0xff]
        %v467 = vld [vmem:[#allocation7 + $0x90] sm:$0xff]
        %v468 = vld [vmem:[#allocation7 + $0x98] sm:$0xff]
        %v469 = vld [vmem:[#allocation7 + $0xa0] sm:$0xff]
        %v470 = vld [vmem:[#allocation7 + $0xa8] sm:$0xff]
        %v471 = vld [vmem:[#allocation7 + $0xb0] sm:$0xff]
        %v472 = vld [vmem:[#allocation7 + $0xb8] sm:$0xff]
        %v473 = vld [vmem:[#allocation7 + $0xc0] sm:$0xff]
        %v474 = vld [vmem:[#allocation7 + $0xc8] sm:$0xff]
        %v475 = vld [vmem:[#allocation7 + $0xd0] sm:$0xff]
        %v476 = vld [vmem:[#allocation7 + $0xd8] sm:$0xff]
        %v477 = vld [vmem:[#allocation7 + $0xe0] sm:$0xff]
        %v478 = vld [vmem:[#allocation7 + $0xe8] sm:$0xff]
        %v479 = vld [vmem:[#allocation7 + $0xf0] sm:$0xff]
        %v480 = vld [vmem:[#allocation7 + $0xf8] sm:$0xff]
        %v481 = vld [vmem:[%s382] sm:$0xff]
        %v482 = vld [vmem:[%s382 + $0x8] sm:$0xff]
        %v483 = vpack.c.bf16 %v482, %v481
        %v484 = vld [vmem:[#allocation8] sm:$0xff]
        %v485 = vld [vmem:[#allocation8 + $0x8] sm:$0xff]
        %v486 = vld [vmem:[#allocation8 + $0x10] sm:$0xff]
        %v487 = vld [vmem:[#allocation8 + $0x18] sm:$0xff]
        %v488 = vld [vmem:[#allocation8 + $0x20] sm:$0xff]
        %v489 = vld [vmem:[#allocation8 + $0x28] sm:$0xff]
        %v490 = vld [vmem:[#allocation8 + $0x30] sm:$0xff]
        %v491 = vld [vmem:[#allocation8 + $0x38] sm:$0xff]
        %v492 = vld [vmem:[#allocation8 + $0x40] sm:$0xff]
        %v493 = vld [vmem:[#allocation8 + $0x48] sm:$0xff]
        %v494 = vld [vmem:[#allocation8 + $0x50] sm:$0xff]
        %v495 = vld [vmem:[#allocation8 + $0x58] sm:$0xff]
        %v496 = vld [vmem:[#allocation8 + $0x60] sm:$0xff]
        %v497 = vld [vmem:[#allocation8 + $0x68] sm:$0xff]
        %v498 = vld [vmem:[#allocation8 + $0x70] sm:$0xff]
        %v499 = vld [vmem:[#allocation8 + $0x78] sm:$0xff]
        %v516 = vunpack.c.l.b16 %v484
        %v517 = vunpack.c.h.b16 %v484
        %v518 = vunpack.c.l.b16 %v485
        %v519 = vunpack.c.h.b16 %v485
        %v520 = vunpack.c.l.b16 %v486
        %v521 = vunpack.c.h.b16 %v486
        %v522 = vunpack.c.l.b16 %v487
        %v523 = vunpack.c.h.b16 %v487
        %v524 = vunpack.c.l.b16 %v488
        %v525 = vunpack.c.h.b16 %v488
        %v526 = vunpack.c.l.b16 %v489
        %v527 = vunpack.c.h.b16 %v489
        %v528 = vunpack.c.l.b16 %v490
        %v529 = vunpack.c.h.b16 %v490
        %v530 = vunpack.c.l.b16 %v491
        %v531 = vunpack.c.h.b16 %v491
        %v532 = vunpack.c.l.b16 %v492
        %v533 = vunpack.c.h.b16 %v492
        %v534 = vunpack.c.l.b16 %v493
        %v535 = vunpack.c.h.b16 %v493
        %v536 = vunpack.c.l.b16 %v494
        %v537 = vunpack.c.h.b16 %v494
        %v538 = vunpack.c.l.b16 %v495
        %v539 = vunpack.c.h.b16 %v495
        %v540 = vunpack.c.l.b16 %v496
        %v541 = vunpack.c.h.b16 %v496
        %v542 = vunpack.c.l.b16 %v497
        %v543 = vunpack.c.h.b16 %v497
        %v544 = vunpack.c.l.b16 %v498
        %v545 = vunpack.c.h.b16 %v498
        %v546 = vunpack.c.l.b16 %v499
        %v547 = vunpack.c.h.b16 %v499
        %v548 = vpack.c.b16 %v518, %v516
        %v549 = vpack.c.b16 %v519, %v517
        %v550 = vpack.c.b16 %v522, %v520
        %v551 = vpack.c.b16 %v523, %v521
        %v552 = vpack.c.b16 %v526, %v524
        %v553 = vpack.c.b16 %v527, %v525
        %v554 = vpack.c.b16 %v530, %v528
        %v555 = vpack.c.b16 %v531, %v529
        %v556 = vpack.c.b16 %v534, %v532
        %v557 = vpack.c.b16 %v535, %v533
        %v558 = vpack.c.b16 %v538, %v536
        %v559 = vpack.c.b16 %v539, %v537
        %v560 = vpack.c.b16 %v542, %v540
        %v561 = vpack.c.b16 %v543, %v541
        %v562 = vpack.c.b16 %v546, %v544
        %v563 = vpack.c.b16 %v547, %v545
        %580 = vmatprep.subr.bf16.mxu0 %v563
        %581 = vmatpush1.bf16.msra.mxu0 %v562
        %582 = vmatprep.subr.bf16.mxu0 %v561
        %583 = vmatpush1.bf16.msra.mxu0 %v560
        %584 = vmatprep.subr.bf16.mxu0 %v559
        %585 = vmatpush1.bf16.msra.mxu0 %v558
        %586 = vmatprep.subr.bf16.mxu0 %v557
        %587 = vmatpush1.bf16.msra.mxu0 %v556
        %588 = vmatprep.subr.bf16.mxu0 %v555
        %589 = vmatpush1.bf16.msra.mxu0 %v554
        %590 = vmatprep.subr.bf16.mxu0 %v553
        %591 = vmatpush1.bf16.msra.mxu0 %v552
        %592 = vmatprep.subr.bf16.mxu0 %v551
        %593 = vmatpush1.bf16.msra.mxu0 %v550
        %594 = vmatprep.subr.bf16.mxu0 %v549
        %595 = vmatpush1.bf16.msra.mxu0 %v548
        %596 = vmatprep.subr.bf16.mxu0 0
        %597 = vmatpush2.bf16.msra.mxu0 0
        %598 = vmatprep.subr.bf16.mxu0 0
        %599 = vmatpush2.bf16.msra.mxu0 0
        %600 = vmatprep.subr.bf16.mxu0 0
        %601 = vmatpush2.bf16.msra.mxu0 0
        %602 = vmatprep.subr.bf16.mxu0 0
        %603 = vmatpush2.bf16.msra.mxu0 0
        %604 = vmatprep.subr.bf16.mxu0 0
        %605 = vmatpush2.bf16.msra.mxu0 0
        %606 = vmatprep.subr.bf16.mxu0 0
        %607 = vmatpush2.bf16.msra.mxu0 0
        %608 = vmatprep.subr.bf16.mxu0 0
        %609 = vmatpush2.bf16.msra.mxu0 0
        %610 = vmatprep.subr.bf16.mxu0 0
        %611 = vmatpush2.bf16.msra.mxu0 0
        %612 = vmatprep.mubr.bf16.mxu0 0
        %613 = vmatmul.mubr.bf16.gmra.mxu0 %v483
        %v614 = vpop.f32.mrf.mxu0
        %v615 = vadd.f32 0.0, %v614
        %v616 = vpop.f32.mrf.mxu0
        %v617 = vadd.f32 0.0, %v616
        %v618 = vpop.f32.mrf.mxu0
        %v619 = vadd.f32 0.0, %v618
        %v620 = vpop.f32.mrf.mxu0
        %v621 = vadd.f32 0.0, %v620
        %622 = vdwg.mxu0
        %v655 = vunpack.c.l.b16 %v449
        %v656 = vunpack.c.h.b16 %v449
        %v657 = vunpack.c.l.b16 %v450
        %v658 = vunpack.c.h.b16 %v450
        %v659 = vunpack.c.l.b16 %v451
        %v660 = vunpack.c.h.b16 %v451
        %v661 = vunpack.c.l.b16 %v452
        %v662 = vunpack.c.h.b16 %v452
        %v663 = vunpack.c.l.b16 %v453
        %v664 = vunpack.c.h.b16 %v453
        %v665 = vunpack.c.l.b16 %v454
        %v666 = vunpack.c.h.b16 %v454
        %v667 = vunpack.c.l.b16 %v455
        %v668 = vunpack.c.h.b16 %v455
        %v669 = vunpack.c.l.b16 %v456
        %v670 = vunpack.c.h.b16 %v456
        %v671 = vunpack.c.l.b16 %v457
        %v672 = vunpack.c.h.b16 %v457
        %v673 = vunpack.c.l.b16 %v458
        %v674 = vunpack.c.h.b16 %v458
        %v675 = vunpack.c.l.b16 %v459
        %v676 = vunpack.c.h.b16 %v459
        %v677 = vunpack.c.l.b16 %v460
        %v678 = vunpack.c.h.b16 %v460
        %v679 = vunpack.c.l.b16 %v461
        %v680 = vunpack.c.h.b16 %v461
        %v681 = vunpack.c.l.b16 %v462
        %v682 = vunpack.c.h.b16 %v462
        %v683 = vunpack.c.l.b16 %v463
        %v684 = vunpack.c.h.b16 %v463
        %v685 = vunpack.c.l.b16 %v464
        %v686 = vunpack.c.h.b16 %v464
        %v687 = vunpack.c.l.b16 %v465
        %v688 = vunpack.c.h.b16 %v465
        %v689 = vunpack.c.l.b16 %v466
        %v690 = vunpack.c.h.b16 %v466
        %v691 = vunpack.c.l.b16 %v467
        %v692 = vunpack.c.h.b16 %v467
        %v693 = vunpack.c.l.b16 %v468
        %v694 = vunpack.c.h.b16 %v468
        %v695 = vunpack.c.l.b16 %v469
        %v696 = vunpack.c.h.b16 %v469
        %v697 = vunpack.c.l.b16 %v470
        %v698 = vunpack.c.h.b16 %v470
        %v699 = vunpack.c.l.b16 %v471
        %v700 = vunpack.c.h.b16 %v471
        %v701 = vunpack.c.l.b16 %v472
        %v702 = vunpack.c.h.b16 %v472
        %v703 = vunpack.c.l.b16 %v473
        %v704 = vunpack.c.h.b16 %v473
        %v705 = vunpack.c.l.b16 %v474
        %v706 = vunpack.c.h.b16 %v474
        %v707 = vunpack.c.l.b16 %v475
        %v708 = vunpack.c.h.b16 %v475
        %v709 = vunpack.c.l.b16 %v476
        %v710 = vunpack.c.h.b16 %v476
        %v711 = vunpack.c.l.b16 %v477
        %v712 = vunpack.c.h.b16 %v477
        %v713 = vunpack.c.l.b16 %v478
        %v714 = vunpack.c.h.b16 %v478
        %v715 = vunpack.c.l.b16 %v479
        %v716 = vunpack.c.h.b16 %v479
        %v717 = vunpack.c.l.b16 %v480
        %v718 = vunpack.c.h.b16 %v480
        %v719 = vpack.c.b16 %v657, %v655
        %v720 = vpack.c.b16 %v658, %v656
        %v721 = vpack.c.b16 %v661, %v659
        %v722 = vpack.c.b16 %v662, %v660
        %v723 = vpack.c.b16 %v665, %v663
        %v724 = vpack.c.b16 %v666, %v664
        %v725 = vpack.c.b16 %v669, %v667
        %v726 = vpack.c.b16 %v670, %v668
        %v727 = vpack.c.b16 %v673, %v671
        %v728 = vpack.c.b16 %v674, %v672
        %v729 = vpack.c.b16 %v677, %v675
        %v730 = vpack.c.b16 %v678, %v676
        %v731 = vpack.c.b16 %v681, %v679
        %v732 = vpack.c.b16 %v682, %v680
        %v733 = vpack.c.b16 %v685, %v683
        %v734 = vpack.c.b16 %v686, %v684
        %v735 = vpack.c.b16 %v689, %v687
        %v736 = vpack.c.b16 %v690, %v688
        %v737 = vpack.c.b16 %v693, %v691
        %v738 = vpack.c.b16 %v694, %v692
        %v739 = vpack.c.b16 %v697, %v695
        %v740 = vpack.c.b16 %v698, %v696
        %v741 = vpack.c.b16 %v701, %v699
        %v742 = vpack.c.b16 %v702, %v700
        %v743 = vpack.c.b16 %v705, %v703
        %v744 = vpack.c.b16 %v706, %v704
        %v745 = vpack.c.b16 %v709, %v707
        %v746 = vpack.c.b16 %v710, %v708
        %v747 = vpack.c.b16 %v713, %v711
        %v748 = vpack.c.b16 %v714, %v712
        %v749 = vpack.c.b16 %v717, %v715
        %v750 = vpack.c.b16 %v718, %v716
        %783 = vmatprep.subr.bf16.mxu0 %v734
        %784 = vmatpush1.bf16.msra.mxu0 %v733
        %785 = vmatprep.subr.bf16.mxu0 %v732
        %786 = vmatpush1.bf16.msra.mxu0 %v731
        %787 = vmatprep.subr.bf16.mxu0 %v730
        %788 = vmatpush1.bf16.msra.mxu0 %v729
        %789 = vmatprep.subr.bf16.mxu0 %v728
        %790 = vmatpush1.bf16.msra.mxu0 %v727
        %791 = vmatprep.subr.bf16.mxu0 %v726
        %792 = vmatpush1.bf16.msra.mxu0 %v725
        %793 = vmatprep.subr.bf16.mxu0 %v724
        %794 = vmatpush1.bf16.msra.mxu0 %v723
        %795 = vmatprep.subr.bf16.mxu0 %v722
        %796 = vmatpush1.bf16.msra.mxu0 %v721
        %797 = vmatprep.subr.bf16.mxu0 %v720
        %798 = vmatpush1.bf16.msra.mxu0 %v719
        %799 = vmatprep.subr.bf16.mxu0 %v750
        %800 = vmatpush2.bf16.msra.mxu0 %v749
        %801 = vmatprep.subr.bf16.mxu0 %v748
        %802 = vmatpush2.bf16.msra.mxu0 %v747
        %803 = vmatprep.subr.bf16.mxu0 %v746
        %804 = vmatpush2.bf16.msra.mxu0 %v745
        %805 = vmatprep.subr.bf16.mxu0 %v744
        %806 = vmatpush2.bf16.msra.mxu0 %v743
        %807 = vmatprep.subr.bf16.mxu0 %v742
        %808 = vmatpush2.bf16.msra.mxu0 %v741
        %809 = vmatprep.subr.bf16.mxu0 %v740
        %810 = vmatpush2.bf16.msra.mxu0 %v739
        %811 = vmatprep.subr.bf16.mxu0 %v738
        %812 = vmatpush2.bf16.msra.mxu0 %v737
        %813 = vmatprep.subr.bf16.mxu0 %v736
        %814 = vmatpush2.bf16.msra.mxu0 %v735
        %815 = vmatprep.mubr.bf16.mxu0 %v448
        %816 = vmatmul.mubr.bf16.gmra.mxu0 %v447
        %v817 = vpop.f32.mrf.mxu0
        %v818 = vadd.f32 %v615, %v817
        %v819 = vpop.f32.mrf.mxu0
        %v820 = vadd.f32 %v617, %v819
        %v821 = vpop.f32.mrf.mxu0
        %v822 = vadd.f32 %v619, %v821
        %v823 = vpop.f32.mrf.mxu0
        %v824 = vadd.f32 %v621, %v823
        %825 = vdwg.mxu0
        %v826 = vld [vmem:[%s4] sm:$0x3]
        %v828 = vlaneseq
        %v829 = vshrl.u32 %v828, 7
        %v830 = vsub.s32 0, %v829
        %v831 = vrot.slane %v826, %v830
        %v832 = vlaneseq
        %v833 = vshrl.u32 %v832, 7
        %v834 = vsub.s32 1, %v833
        %v835 = vrot.slane %v826, %v834
        %v838 = vadd.f32 %v818, %v831
        %v839 = vadd.f32 %v820, %v835
        %v840 = vadd.f32 %v822, %v831
        %v841 = vadd.f32 %v824, %v835
        %vm842 = vcmp.gt.f32.partialorder %v838, 0.0
        %vm843 = vcmp.gt.f32.partialorder %v839, 0.0
        %vm844 = vcmp.gt.f32.partialorder %v840, 0.0
        %vm845 = vcmp.gt.f32.partialorder %v841, 0.0
        %v846 = vmul.f32 %v838, 0.2
        %v847 = vmul.f32 %v839, 0.2
        %v848 = vmul.f32 %v840, 0.2
        %v849 = vmul.f32 %v841, 0.2
        %v850 = vsel %vm842, %v838, %v846
        %v851 = vsel %vm843, %v839, %v847
        %v852 = vsel %vm844, %v840, %v848
        %v853 = vsel %vm845, %v841, %v849
        %v854 = vpack.c.bf16 %v852, %v850
        %v855 = vpack.c.bf16 %v853, %v851
        %v856 = vld [vmem:[#allocation10] sm:$0xff]
        %v857 = vld [vmem:[#allocation10 + $0x8] sm:$0xff]
        %v858 = vld [vmem:[#allocation10 + $0x10] sm:$0xff]
        %v859 = vld [vmem:[#allocation10 + $0x18] sm:$0xff]
        %v860 = vld [vmem:[#allocation10 + $0x20] sm:$0xff]
        %v861 = vld [vmem:[#allocation10 + $0x28] sm:$0xff]
        %v862 = vld [vmem:[#allocation10 + $0x30] sm:$0xff]
        %v863 = vld [vmem:[#allocation10 + $0x38] sm:$0xff]
        %v864 = vld [vmem:[#allocation10 + $0x40] sm:$0xff]
        %v865 = vld [vmem:[#allocation10 + $0x48] sm:$0xff]
        %v866 = vld [vmem:[#allocation10 + $0x50] sm:$0xff]
        %v867 = vld [vmem:[#allocation10 + $0x58] sm:$0xff]
        %v868 = vld [vmem:[#allocation10 + $0x60] sm:$0xff]
        %v869 = vld [vmem:[#allocation10 + $0x68] sm:$0xff]
        %v870 = vld [vmem:[#allocation10 + $0x70] sm:$0xff]
        %v871 = vld [vmem:[#allocation10 + $0x78] sm:$0xff]
        %v872 = vld [vmem:[#allocation10 + $0x80] sm:$0xff]
        %v873 = vld [vmem:[#allocation10 + $0x88] sm:$0xff]
        %v874 = vld [vmem:[#allocation10 + $0x90] sm:$0xff]
        %v875 = vld [vmem:[#allocation10 + $0x98] sm:$0xff]
        %v876 = vld [vmem:[#allocation10 + $0xa0] sm:$0xff]
        %v877 = vld [vmem:[#allocation10 + $0xa8] sm:$0xff]
        %v878 = vld [vmem:[#allocation10 + $0xb0] sm:$0xff]
        %v879 = vld [vmem:[#allocation10 + $0xb8] sm:$0xff]
        %v880 = vld [vmem:[#allocation10 + $0xc0] sm:$0xff]
        %v881 = vld [vmem:[#allocation10 + $0xc8] sm:$0xff]
        %v882 = vld [vmem:[#allocation10 + $0xd0] sm:$0xff]
        %v883 = vld [vmem:[#allocation10 + $0xd8] sm:$0xff]
        %v884 = vld [vmem:[#allocation10 + $0xe0] sm:$0xff]
        %v885 = vld [vmem:[#allocation10 + $0xe8] sm:$0xff]
        %v886 = vld [vmem:[#allocation10 + $0xf0] sm:$0xff]
        %v887 = vld [vmem:[#allocation10 + $0xf8] sm:$0xff]
        %v888 = vld [vmem:[%s6] sm:$0x3]
        %v890 = vlaneseq
        %v891 = vshrl.u32 %v890, 7
        %v892 = vsub.s32 0, %v891
        %v893 = vrot.slane %v888, %v892
        %v894 = vlaneseq
        %v895 = vshrl.u32 %v894, 7
        %v896 = vsub.s32 1, %v895
        %v897 = vrot.slane %v888, %v896
        %v932 = vunpack.c.l.b16 %v856
        %v933 = vunpack.c.h.b16 %v856
        %v934 = vunpack.c.l.b16 %v857
        %v935 = vunpack.c.h.b16 %v857
        %v936 = vunpack.c.l.b16 %v858
        %v937 = vunpack.c.h.b16 %v858
        %v938 = vunpack.c.l.b16 %v859
        %v939 = vunpack.c.h.b16 %v859
        %v940 = vunpack.c.l.b16 %v860
        %v941 = vunpack.c.h.b16 %v860
        %v942 = vunpack.c.l.b16 %v861
        %v943 = vunpack.c.h.b16 %v861
        %v944 = vunpack.c.l.b16 %v862
        %v945 = vunpack.c.h.b16 %v862
        %v946 = vunpack.c.l.b16 %v863
        %v947 = vunpack.c.h.b16 %v863
        %v948 = vunpack.c.l.b16 %v864
        %v949 = vunpack.c.h.b16 %v864
        %v950 = vunpack.c.l.b16 %v865
        %v951 = vunpack.c.h.b16 %v865
        %v952 = vunpack.c.l.b16 %v866
        %v953 = vunpack.c.h.b16 %v866
        %v954 = vunpack.c.l.b16 %v867
        %v955 = vunpack.c.h.b16 %v867
        %v956 = vunpack.c.l.b16 %v868
        %v957 = vunpack.c.h.b16 %v868
        %v958 = vunpack.c.l.b16 %v869
        %v959 = vunpack.c.h.b16 %v869
        %v960 = vunpack.c.l.b16 %v870
        %v961 = vunpack.c.h.b16 %v870
        %v962 = vunpack.c.l.b16 %v871
        %v963 = vunpack.c.h.b16 %v871
        %v964 = vunpack.c.l.b16 %v872
        %v965 = vunpack.c.h.b16 %v872
        %v966 = vunpack.c.l.b16 %v873
        %v967 = vunpack.c.h.b16 %v873
        %v968 = vunpack.c.l.b16 %v874
        %v969 = vunpack.c.h.b16 %v874
        %v970 = vunpack.c.l.b16 %v875
        %v971 = vunpack.c.h.b16 %v875
        %v972 = vunpack.c.l.b16 %v876
        %v973 = vunpack.c.h.b16 %v876
        %v974 = vunpack.c.l.b16 %v877
        %v975 = vunpack.c.h.b16 %v877
        %v976 = vunpack.c.l.b16 %v878
        %v977 = vunpack.c.h.b16 %v878
        %v978 = vunpack.c.l.b16 %v879
        %v979 = vunpack.c.h.b16 %v879
        %v980 = vunpack.c.l.b16 %v880
        %v981 = vunpack.c.h.b16 %v880
        %v982 = vunpack.c.l.b16 %v881
        %v983 = vunpack.c.h.b16 %v881
        %v984 = vunpack.c.l.b16 %v882
        %v985 = vunpack.c.h.b16 %v882
        %v986 = vunpack.c.l.b16 %v883
        %v987 = vunpack.c.h.b16 %v883
        %v988 = vunpack.c.l.b16 %v884
        %v989 = vunpack.c.h.b16 %v884
        %v990 = vunpack.c.l.b16 %v885
        %v991 = vunpack.c.h.b16 %v885
        %v992 = vunpack.c.l.b16 %v886
        %v993 = vunpack.c.h.b16 %v886
        %v994 = vunpack.c.l.b16 %v887
        %v995 = vunpack.c.h.b16 %v887
        %v996 = vpack.c.b16 %v934, %v932
        %v997 = vpack.c.b16 %v935, %v933
        %v998 = vpack.c.b16 %v938, %v936
        %v999 = vpack.c.b16 %v939, %v937
        %v1000 = vpack.c.b16 %v942, %v940
        %v1001 = vpack.c.b16 %v943, %v941
        %v1002 = vpack.c.b16 %v946, %v944
        %v1003 = vpack.c.b16 %v947, %v945
        %v1004 = vpack.c.b16 %v950, %v948
        %v1005 = vpack.c.b16 %v951, %v949
        %v1006 = vpack.c.b16 %v954, %v952
        %v1007 = vpack.c.b16 %v955, %v953
        %v1008 = vpack.c.b16 %v958, %v956
        %v1009 = vpack.c.b16 %v959, %v957
        %v1010 = vpack.c.b16 %v962, %v960
        %v1011 = vpack.c.b16 %v963, %v961
        %v1012 = vpack.c.b16 %v966, %v964
        %v1013 = vpack.c.b16 %v967, %v965
        %v1014 = vpack.c.b16 %v970, %v968
        %v1015 = vpack.c.b16 %v971, %v969
        %v1016 = vpack.c.b16 %v974, %v972
        %v1017 = vpack.c.b16 %v975, %v973
        %v1018 = vpack.c.b16 %v978, %v976
        %v1019 = vpack.c.b16 %v979, %v977
        %v1020 = vpack.c.b16 %v982, %v980
        %v1021 = vpack.c.b16 %v983, %v981
        %v1022 = vpack.c.b16 %v986, %v984
        %v1023 = vpack.c.b16 %v987, %v985
        %v1024 = vpack.c.b16 %v990, %v988
        %v1025 = vpack.c.b16 %v991, %v989
        %v1026 = vpack.c.b16 %v994, %v992
        %v1027 = vpack.c.b16 %v995, %v993
        %1060 = vmatprep.subr.bf16.mxu0 %v1011
        %1061 = vmatpush1.bf16.msra.mxu0 %v1010
        %1062 = vmatprep.subr.bf16.mxu0 %v1009
        %1063 = vmatpush1.bf16.msra.mxu0 %v1008
        %1064 = vmatprep.subr.bf16.mxu0 %v1007
        %1065 = vmatpush1.bf16.msra.mxu0 %v1006
        %1066 = vmatprep.subr.bf16.mxu0 %v1005
        %1067 = vmatpush1.bf16.msra.mxu0 %v1004
        %1068 = vmatprep.subr.bf16.mxu0 %v1003
        %1069 = vmatpush1.bf16.msra.mxu0 %v1002
        %1070 = vmatprep.subr.bf16.mxu0 %v1001
        %1071 = vmatpush1.bf16.msra.mxu0 %v1000
        %1072 = vmatprep.subr.bf16.mxu0 %v999
        %1073 = vmatpush1.bf16.msra.mxu0 %v998
        %1074 = vmatprep.subr.bf16.mxu0 %v997
        %1075 = vmatpush1.bf16.msra.mxu0 %v996
        %1076 = vmatprep.subr.bf16.mxu0 %v1027
        %1077 = vmatpush2.bf16.msra.mxu0 %v1026
        %1078 = vmatprep.subr.bf16.mxu0 %v1025
        %1079 = vmatpush2.bf16.msra.mxu0 %v1024
        %1080 = vmatprep.subr.bf16.mxu0 %v1023
        %1081 = vmatpush2.bf16.msra.mxu0 %v1022
        %1082 = vmatprep.subr.bf16.mxu0 %v1021
        %1083 = vmatpush2.bf16.msra.mxu0 %v1020
        %1084 = vmatprep.subr.bf16.mxu0 %v1019
        %1085 = vmatpush2.bf16.msra.mxu0 %v1018
        %1086 = vmatprep.subr.bf16.mxu0 %v1017
        %1087 = vmatpush2.bf16.msra.mxu0 %v1016
        %1088 = vmatprep.subr.bf16.mxu0 %v1015
        %1089 = vmatpush2.bf16.msra.mxu0 %v1014
        %1090 = vmatprep.subr.bf16.mxu0 %v1013
        %1091 = vmatpush2.bf16.msra.mxu0 %v1012
        %1092 = vmatprep.mubr.bf16.mxu0 %v855
        %1093 = vmatmul.mubr.bf16.gmra.mxu0 %v854
        %v1094 = vpop.f32.mrf.mxu0
        %v1095 = vadd.f32 %v893, %v1094
        %v1096 = vpop.f32.mrf.mxu0
        %v1097 = vadd.f32 %v897, %v1096
        %v1098 = vpop.f32.mrf.mxu0
        %v1099 = vadd.f32 %v893, %v1098
        %v1100 = vpop.f32.mrf.mxu0
        %v1101 = vadd.f32 %v897, %v1100
        %1102 = vdwg.mxu0
        %vm1103 = vcmp.gt.f32.partialorder %v1095, 0.0
        %vm1104 = vcmp.gt.f32.partialorder %v1097, 0.0
        %vm1105 = vcmp.gt.f32.partialorder %v1099, 0.0
        %vm1106 = vcmp.gt.f32.partialorder %v1101, 0.0
        %v1107 = vmul.f32 %v1095, 0.2
        %v1108 = vmul.f32 %v1097, 0.2
        %v1109 = vmul.f32 %v1099, 0.2
        %v1110 = vmul.f32 %v1101, 0.2
        %v1111 = vsel %vm1103, %v1095, %v1107
        %v1112 = vsel %vm1104, %v1097, %v1108
        %v1113 = vsel %vm1105, %v1099, %v1109
        %v1114 = vsel %vm1106, %v1101, %v1110
        %v1115 = vld [vmem:[%s7] sm:$0x3]
        %v1116 = vunpack.c.l.bf16 %v1115
        %v1118 = vlaneseq
        %v1119 = vshrl.u32 %v1118, 7
        %v1120 = vsub.s32 0, %v1119
        %v1121 = vrot.slane %v1116, %v1120
        %v1122 = vlaneseq
        %v1123 = vshrl.u32 %v1122, 7
        %v1124 = vsub.s32 2, %v1123
        %v1125 = vrot.slane %v1116, %v1124
        %v1128 = vlaneseq
        %v1129 = vshrl.u32 %v1128, 7
        %v1130 = vsub.s32 0, %v1129
        %v1131 = vrot.slane %v1121, %v1130
        %v1132 = vlaneseq
        %v1133 = vshrl.u32 %v1132, 7
        %v1134 = vsub.s32 0, %v1133
        %v1135 = vrot.slane %v1125, %v1134
        %v1136 = vmul.f32 %v1111, %v1131
        %v1137 = vmul.f32 %v1112, %v1135
        %v1138 = vmul.f32 %v1113, %v1131
        %v1139 = vmul.f32 %v1114, %v1135
        %v1140 = vadd.f32 %v1136, %v1137
        %1141 = vadd.xlane.f32.xlu0 %v1140
        %v1142 = vpop.xlane.xlu0 %1141
        %v1143 = vadd.f32 %v1138, %v1139
        %1144 = vadd.xlane.f32.xlu0 %v1143
        %v1145 = vpop.xlane.xlu0 %1144
        %v1146 = vld [vmem:[#allocation2] sm:$0x1]
        %v1148 = vlaneseq
        %v1149 = vshrl.u32 %v1148, 7
        %v1150 = vsub.s32 0, %v1149
        %v1151 = vrot.slane %v1146, %v1150
        %v1153 = vadd.f32 %v1142, %v1151
        %v1154 = vadd.f32 %v1145, %v1151
        %vm1155 = vcmask 7168
        %1156 = vst.msk [vmem:[%s440] sm:$0xff] %vm1155, %v1153
        %1157 = vst.msk [vmem:[%s440 + $0x8] sm:$0xff] %vm1155, %v1154
        %s1158 = smul.u32 2, %s29
        %p1159 = scmp.lt.s32.totalorder %s1158, 3
        %s1160 = scalar_select %p1159, %s1158, 3
        %s1161 = smul.addr %s1160, 8
        %s1162 = scalar_lea.vmem %s9, %s1161
        // Predicated region
        $region77: #{tpu_custom_call.1} parent=55 // pred_check
          %p1163 = pneg %p246
        $region78: #{tpu_custom_call.1} parent=55 // pred_check_branch
          %1165 = sbr.rel (%p1163) target = $region80
        $region79: #{tpu_custom_call.1} parent=55 // pred_region
          %s1166 = smul.u32 2, %s29
        $region80: #{tpu_custom_call.1} parent=55 // pred_fallthru
          _
      $region56: #{tpu_custom_call.1} parent=5 // pred_fallthru
        _
      %p1167 = scmp.le.s32.totalorder 2, %s24
      // Predicated region
      $region81: #{tpu_custom_call.1} parent=5 // pred_check
        %p1168 = pneg %p1167
      $region82: #{tpu_custom_call.1} parent=5 // pred_check_branch
        %1170 = sbr.rel (%p1168) target = $region84
      $region83: #{tpu_custom_call.1} parent=5 // pred_region
        %s1171 = ssub.s32 %s24, 2
        // Predicated region
        $region85: #{tpu_custom_call.1} parent=83 // pred_check
          %p1172 = pneg %p252
        $region86: #{tpu_custom_call.1} parent=83 // pred_check_branch
          %1174 = sbr.rel (%p1172) target = $region88
        $region87: #{tpu_custom_call.1} parent=83 // pred_region
          %s1175 = smul.u32 2, %s30
          %p1176 = scmp.lt.s32.totalorder %s1175, 3
          %s1177 = scalar_select %p1176, %s1175, 3
          %s1178 = smul.addr %s1177, 8
          %s1179 = scalar_lea.vmem %s9, %s1178
        $region88: #{tpu_custom_call.1} parent=83 // pred_fallthru
          _
      $region84: #{tpu_custom_call.1} parent=5 // pred_fallthru
        _
    $region6: #{tpu_custom_call.1} parent=1 // loop_footer
      %s28 = sadd.s32 1, %s24
    $region7: #{tpu_custom_call.1} parent=1 // loop_footer_branch
      %23 = sbr.rel target = $region3
    $region8: #{tpu_custom_call.1} parent=1 // loop_exit
      _
    %1180 = vsyncpa [#allocation4], 1
    %s1181 = scalar_lea.sflag [#allocation4], 1
    %1182 = vsyncpa %s1181, 1
    %1183 = vsyncpa [#allocation6], 1
    %s1184 = scalar_lea.sflag [#allocation6], 1
    %1185 = vsyncpa %s1184, 1
    %1186 = vsyncpa [#allocation9], 1

</llo_original>
